<compile_context>
chip_gen: v7x
topology: tpu7x:2x2x1
jax: 0.10.0
libtpu: 0.0.40
codegen_flags: <defaults>
</compile_context>

<pallas_src>
import functools
from typing import NamedTuple

import jax
import jax.numpy as jnp
from jax.experimental import pallas as pl
from jax.experimental.pallas import tpu as pltpu


def _round_up(x, m):
    return ((x + m - 1) // m) * m


def _cdiv(a, b):
    return (a + b - 1) // b


# --------------------------------------------------------------------------
# Kernels
# --------------------------------------------------------------------------
def _linear_kernel_single(x_ref, w_ref, b_ref, o_ref):
    """Single K block: whole reduction in one dot, no accumulator scratch."""
    x = x_ref[...].astype(w_ref.dtype)
    acc = jnp.dot(x, w_ref[...], preferred_element_type=jnp.float32)
    o_ref[...] = (acc + b_ref[...].astype(jnp.float32)).astype(o_ref.dtype)


def _linear_kernel_ktiled(x_ref, w_ref, b_ref, o_ref, acc_ref):
    """K-tiled variant: f32 VMEM accumulator over the 'arbitrary' K axis."""
    k = pl.program_id(2)

    @pl.when(k == 0)
    def _():
        acc_ref[...] = jnp.zeros_like(acc_ref)

    x = x_ref[...].astype(w_ref.dtype)
    acc_ref[...] += jnp.dot(x, w_ref[...], preferred_element_type=jnp.float32)

    @pl.when(k == pl.num_programs(2) - 1)
    def _():
        o_ref[...] = (acc_ref[...] + b_ref[...].astype(jnp.float32)).astype(
            o_ref.dtype
        )


# --------------------------------------------------------------------------
# Parameter preparation (one-time, hoisted out of the forward)
# --------------------------------------------------------------------------
class EmbeddingHeadParams(NamedTuple):
    w_t: jax.Array   # (D_pad, E_pad) pre-transposed, lane-padded weight
    bias: jax.Array  # (1, E_pad) float32, lane-padded bias
    in_dim: int      # D
    out_dim: int     # E
    tile_n: int
    tile_k: int


def _pick_tile(dim, single_block_cap, candidates):
    """Lane-aligned tile for `dim`.

    If the 128-aligned dim fits under `single_block_cap`, cover it with one
    block (no grid axis along this dim).  Otherwise pick the largest candidate
    whose zero padding stays <= 12.5% of the real dim; worst case fall back to
    128 (minimal padding, more grid steps).
    """
    d128 = _round_up(dim, 128)
    if d128 <= single_block_cap:
        return d128
    for c in candidates:
        pad = _round_up(dim, c) - dim
        if pad * 8 <= dim:
            return c
    return 128


def prepare_embedding_head_params(weight, bias, *, weight_dtype=jnp.bfloat16):
    """weight: (E, D) PyTorch nn.Linear layout, bias: (E,).

    Returns EmbeddingHeadParams with a pre-transposed, zero-padded (and by
    default bf16) weight of shape (D_pad, E_pad) plus a padded f32 bias and
    the tile sizes the forward pass must use.
    """
    E, D = weight.shape
    tile_k = _pick_tile(D, single_block_cap=2048, candidates=(2048, 1024, 512, 256))
    tile_n = _pick_tile(E, single_block_cap=1024, candidates=(1024, 512, 256))
    D_pad = _round_up(D, tile_k)
    E_pad = _round_up(E, tile_n)
    w_t = jnp.pad(
        weight.astype(jnp.float32).T, ((0, D_pad - D), (0, E_pad - E))
    ).astype(weight_dtype)
    b2 = jnp.pad(
        bias.astype(jnp.float32).reshape(1, E), ((0, 0), (0, E_pad - E))
    )
    return EmbeddingHeadParams(
        w_t=w_t, bias=b2, in_dim=D, out_dim=E, tile_n=tile_n, tile_k=tile_k
    )


# --------------------------------------------------------------------------
# Forward
# --------------------------------------------------------------------------
def embedding_head_forward(x, params: EmbeddingHeadParams, *, tile_m_cap=512):
    """y = x @ W^T + b.  x: (M, D).  Returns (M, out_dim) in x.dtype."""
    out_dtype = x.dtype
    M, D = x.shape
    assert D == params.in_dim, f"got D={D}, expected {params.in_dim}"
    D_pad, E_pad = params.w_t.shape
    tile_n, tile_k = params.tile_n, params.tile_k

    # M tiling: last block should not be mostly padding, and large M uses big
    # tiles (fewer re-streams of the weight matrix from HBM).
    num_i = max(1, _cdiv(M, tile_m_cap))
    tile_m = _round_up(_cdiv(M, num_i), 16)
    num_j = E_pad // tile_n
    num_k = D_pad // tile_k

    # v7x has 2 TensorCores: make sure the parallel grid extent is >= 2 so
    # both cores get work.  On single-TC chips (v5e/v6e) the extra grid step
    # costs ~0.35us, which is noise.
    if num_i * num_j == 1:
        if tile_n % 256 == 0:
            tile_n //= 2
            num_j = 2
        elif M >= 32:
            num_i = 2
            tile_m = _round_up(_cdiv(M, 2), 16)
    M_pad = num_i * tile_m

    # Zero-pad activations; zero K columns add nothing to the accumulator.
    x_p = x
    if (M_pad, D_pad) != (M, D):
        x_p = jnp.pad(x, ((0, M_pad - M), (0, D_pad - D)))

    if num_k == 1:
        grid = (num_i, num_j)
        in_specs = [
            pl.BlockSpec((tile_m, tile_k), lambda i, j: (i, 0)),   # x
            pl.BlockSpec((tile_k, tile_n), lambda i, j: (0, j)),   # W^T
            pl.BlockSpec((1, tile_n), lambda i, j: (0, j)),        # bias
        ]
        out_specs = pl.BlockSpec((tile_m, tile_n), lambda i, j: (i, j))
        scratch_shapes = []
        kernel = _linear_kernel_single
        dims = ("parallel", "parallel")
    else:
        grid = (num_i, num_j, num_k)
        in_specs = [
            pl.BlockSpec((tile_m, tile_k), lambda i, j, k: (i, k)),  # x
            pl.BlockSpec((tile_k, tile_n), lambda i, j, k: (k, j)),  # W^T
            pl.BlockSpec((1, tile_n), lambda i, j, k: (0, j)),       # bias
        ]
        out_specs = pl.BlockSpec((tile_m, tile_n), lambda i, j, k: (i, j))
        scratch_shapes = [pltpu.VMEM((tile_m, tile_n), jnp.float32)]
        kernel = _linear_kernel_ktiled
        dims = ("parallel", "parallel", "arbitrary")

    # VMEM budget: double-buffered tiles + accumulator, clamped to 3/4 of the
    # physical VMEM of whatever chip we are on (64 MiB fallback is safe on
    # v5e/v6e/v7x).
    x_bytes = tile_m * tile_k * x_p.dtype.itemsize
    w_bytes = tile_k * tile_n * params.w_t.dtype.itemsize
    b_bytes = tile_n * params.bias.dtype.itemsize
    o_bytes = tile_m * tile_n * jnp.dtype(out_dtype).itemsize
    acc_bytes = tile_m * tile_n * 4 if num_k > 1 else 0
    needed = 2 * (x_bytes + w_bytes + b_bytes + o_bytes) + acc_bytes
    phys_vmem = 64 * 1024 * 1024
    try:
        info = pltpu.get_tpu_info()
        phys_vmem = int(getattr(info, "vmem_capacity_bytes", phys_vmem) or phys_vmem)
    except Exception:
        pass
    vmem_limit = int(
        min(max(needed + 8 * 1024 * 1024, 32 * 1024 * 1024), (phys_vmem * 3) // 4)
    )

    cost = pl.CostEstimate(
        flops=2 * M_pad * D_pad * E_pad,
        transcendentals=0,
        bytes_accessed=int(
            num_j * M_pad * D_pad * x_p.dtype.itemsize            # x per N block
            + num_i * D_pad * E_pad * params.w_t.dtype.itemsize   # W per M block
            + E_pad * params.bias.dtype.itemsize
            + M_pad * E_pad * jnp.dtype(out_dtype).itemsize
        ),
    )

    out = pl.pallas_call(
        kernel,
        out_shape=jax.ShapeDtypeStruct((M_pad, E_pad), out_dtype),
        grid_spec=pltpu.PrefetchScalarGridSpec(
            num_scalar_prefetch=0,
            grid=grid,
            in_specs=in_specs,
            out_specs=out_specs,
            scratch_shapes=scratch_shapes,
        ),
        compiler_params=pltpu.CompilerParams(
            dimension_semantics=dims,
            vmem_limit_bytes=vmem_limit,
        ),
        cost_estimate=cost,
    )(x_p, params.w_t, params.bias)

    if (M_pad, E_pad) != (M, params.out_dim):
        out = out[:M, :params.out_dim]
    return out


# --------------------------------------------------------------------------
# Self-test
# --------------------------------------------------------------------------
if __name__ == "__main__":
    key = jax.random.PRNGKey(0)
    k1, k2, k3, k4, k5, k6, k7, k8, k9 = jax.random.split(key, 9)

    # --- Test 1: module-sized shapes, f32 weights (exact numerics) --------
    batch, input_dimension, embedding_dimension = 8, 32, 16
    x = jax.random.normal(k1, (batch, input_dimension), dtype=jnp.float32)
    bound = 1.0 / (input_dimension ** 0.5)
    weight = jax.random.uniform(
        k2, (embedding_dimension, input_dimension),
        minval=-bound, maxval=bound, dtype=jnp.float32)
    bias = jax.random.uniform(
        k3, (embedding_dimension,), minval=-bound, maxval=bound,
        dtype=jnp.float32)

    params_f32 = prepare_embedding_head_params(weight, bias,
                                               weight_dtype=jnp.float32)
    out = jax.block_until_ready(embedding_head_forward(x, params_f32))
    ref = x @ weight.T + bias
    assert out.shape == (batch, embedding_dimension)
    assert jnp.allclose(out, ref, atol=1e-5, rtol=1e-5)

    # --- Test 2: ragged shapes, bf16 weights, single-K / split-M path ------
    M2, D2, E2 = 300, 160, 272
    x2 = jax.random.normal(k4, (M2, D2), dtype=jnp.float32)
    b2nd = 1.0 / (D2 ** 0.5)
    w2 = jax.random.uniform(k5, (E2, D2), minval=-b2nd, maxval=b2nd,
                            dtype=jnp.float32)
    bia2 = jax.random.uniform(k6, (E2,), minval=-b2nd, maxval=b2nd,
                              dtype=jnp.float32)
    params2 = prepare_embedding_head_params(w2, bia2)  # bf16 default
    out2 = jax.block_until_ready(embedding_head_forward(x2, params2))
    ref2 = jnp.dot(x2.astype(jnp.bfloat16), w2.T.astype(jnp.bfloat16),
                   preferred_element_type=jnp.float32) + bia2
    assert out2.shape == (M2, E2)
    assert jnp.allclose(out2, ref2, atol=1e-3, rtol=1e-3)

    # --- Test 3: large D (> 2048) exercises the K-tiled accumulator path ---
    M3, D3, E3 = 100, 2304, 384
    x3 = jax.random.normal(k7, (M3, D3), dtype=jnp.float32)
    b3nd = 1.0 / (D3 ** 0.5)
    w3 = jax.random.uniform(k8, (E3, D3), minval=-b3nd, maxval=b3nd,
                            dtype=jnp.float32)
    bia3 = jax.random.uniform(k9, (E3,), minval=-b3nd, maxval=b3nd,
                              dtype=jnp.float32)
    params3 = prepare_embedding_head_params(w3, bia3)  # bf16 default
    out3 = jax.block_until_ready(embedding_head_forward(x3, params3))
    ref3 = jnp.dot(x3.astype(jnp.bfloat16), w3.T.astype(jnp.bfloat16),
                   preferred_element_type=jnp.float32) + bia3
    assert out3.shape == (M3, E3)
    assert jnp.allclose(out3, ref3, atol=1e-3, rtol=1e-3)

    print("KERNEL_OK")
</pallas_src>

<mosaic_0001>
module attributes {stable_mosaic.version = 11 : i64} {
  func.func @_linear_kernel_single(%arg0: i32, %arg1: i32, %arg2: memref<16x128xf32, #tpu.memory_space<vmem>>, %arg3: memref<128x128xf32, #tpu.memory_space<vmem>>, %arg4: memref<1x128xf32, #tpu.memory_space<vmem>>, %arg5: memref<16x128xf32, #tpu.memory_space<vmem>>) attributes {dimension_semantics = [#tpu.dimension_semantics<parallel>, #tpu.dimension_semantics<parallel>], iteration_bounds = array<i64: 1, 1>, scalar_prefetch = 0 : i64, scratch_operands = 0 : i64, tpu.core_type = #tpu.core_type<tc>, window_params = [{transform_indices = @transform_0, window_bounds = array<i64: 16, 128>}, {transform_indices = @transform_1, window_bounds = array<i64: 128, 128>}, {transform_indices = @transform_2, window_bounds = array<i64: 1, 128>}, {transform_indices = @transform_3, window_bounds = array<i64: 16, 128>}]} {
    %c0 = arith.constant 0 : index
    %c0_0 = arith.constant 0 : index
    %0 = vector.load %arg2[%c0, %c0_0] : memref<16x128xf32, #tpu.memory_space<vmem>>, vector<16x128xf32>
    %c0_1 = arith.constant 0 : index
    %c0_2 = arith.constant 0 : index
    %1 = vector.load %arg3[%c0_1, %c0_2] : memref<128x128xf32, #tpu.memory_space<vmem>>, vector<128x128xf32>
    %cst = arith.constant dense<0.000000e+00> : vector<16x128xf32>
    %2 = tpu.matmul %0, %1, %cst {dimension_numbers = #tpu.dot_dimension_numbers<[1], [0], [0], [1], [0, 0, 1, 1], [], []>} : vector<16x128xf32>, vector<128x128xf32>, vector<16x128xf32> -> vector<16x128xf32>
    %c0_3 = arith.constant 0 : index
    %c0_4 = arith.constant 0 : index
    %3 = vector.load %arg4[%c0_3, %c0_4] : memref<1x128xf32, #tpu.memory_space<vmem>>, vector<1x128xf32>
    %4 = vector.broadcast %3 : vector<1x128xf32> to vector<16x128xf32>
    %5 = arith.addf %2, %4 : vector<16x128xf32>
    %c0_5 = arith.constant 0 : index
    %c0_6 = arith.constant 0 : index
    %6 = vector.load %arg5[%c0_5, %c0_6] : memref<16x128xf32, #tpu.memory_space<vmem>>, vector<16x128xf32>
    tpu.vector_store %arg5[%c0_5, %c0_6], %5 {strides = array<i32>} : memref<16x128xf32, #tpu.memory_space<vmem>>, vector<16x128xf32>,
    return
  }
  func.func @transform_0(%arg0: i32, %arg1: i32) -> (i32, i32) {
    %c0_i32 = arith.constant 0 : i32
    %c0_i32_0 = arith.constant 0 : i32
    return %arg0, %c0_i32 : i32, i32
  }
  func.func @transform_1(%arg0: i32, %arg1: i32) -> (i32, i32) {
    %c0_i32 = arith.constant 0 : i32
    %c0_i32_0 = arith.constant 0 : i32
    return %c0_i32, %arg1 : i32, i32
  }
  func.func @transform_2(%arg0: i32, %arg1: i32) -> (i32, i32) {
    %c0_i32 = arith.constant 0 : i32
    %c0_i32_0 = arith.constant 0 : i32
    return %c0_i32, %arg1 : i32, i32
  }
  func.func @transform_3(%arg0: i32, %arg1: i32) -> (i32, i32) {
    %c0_i32 = arith.constant 0 : i32
    return %arg0, %arg1 : i32, i32
  }
}

</mosaic_0001>

<llo_original>
// kernel: tpu_custom_call.1
$region0: #{tpu_custom_call.1}
  #allocation0 [shape = 'u32[]', space=smem, size = 0x4, offset = 0x4, fixed_abs, tag = 'smem constant byte address 0x4 - core index']
  #allocation1 [shape = 'u32[144,128]{1,0:T(1,128)}', space=vmem, size = 0x12000, scoped, tag = 'internal scratch']
  %s0 = inlined_call_operand.hbm [shape: f32[16,128], index: 0, kind: input, shape index: {}]
  %s1 = inlined_call_operand.hbm [shape: f32[128,128], index: 1, kind: input, shape index: {}]
  %s2 = inlined_call_operand.vmem [shape: f32[1,128], index: 2, kind: input, shape index: {}]
  %s3 = inlined_call_operand.hbm [shape: f32[16,128], index: 3, kind: output, shape index: {}]
  %s4 = sld [smem:[#allocation0]]
  $region30: #{tpu_custom_call.1} parent=0
    _
  %s6 = ssub.s32 1, %s4
  %s7 = scalar_select 0, %s6, %s4
  $region1: #{tpu_custom_call.1} parent=0
    #allocation2 [shape = 'u8[8192]{0}', space=vmem, size = 0x2000, scoped, tag = 'input window, operand 0, single buffered']
    #allocation3 [shape = 's32[1]{0}', space=sflag, size = 0x4, scoped, tag = 'scoped memory for tpu_custom_call.1']
    #allocation4 [shape = 's32[1]{0}', space=sflag, size = 0x4, scoped, tag = 'scoped memory for tpu_custom_call.1']
    #allocation5 [shape = 'u8[65536]{0}', space=vmem, size = 0x10000, scoped, tag = 'input window, operand 1, single buffered']
    #allocation6 [shape = 's32[1]{0}', space=sflag, size = 0x4, scoped, tag = 'scoped memory for tpu_custom_call.1']
    #allocation7 [shape = 'u8[8192]{0}', space=vmem, size = 0x2000, scoped, tag = 'output window, operand 0, single buffered']
    %8 = vsyncpa [#allocation3], 0
    %9 = vsyncpa [#allocation6], 0
    %10 = vsyncpa [#allocation4], 0
    // Predicated region
    $region2: #{tpu_custom_call.1} parent=1 // pred_check
      _
    $region3: #{tpu_custom_call.1} parent=1 // pred_check_branch
      %12 = sbr.rel (0) target = $region5
    $region4: #{tpu_custom_call.1} parent=1 // pred_region
      %s14 = ssub.s32 256, 256
      %15 = vsyncadd [#allocation3], %s14
      %s16 = sshll.u32 [#allocation2], 4
      %s17 = int_to_ptr.vmem [resolvable:$true] %s16
      %22 = dma.hbm_to_vmem [thread:$0]  %s0, 256, %s17, [#allocation3], 128, 128, 8
    $region5: #{tpu_custom_call.1} parent=1 // pred_fallthru
      _
    // Predicated region
    $region6: #{tpu_custom_call.1} parent=1 // pred_check
      _
    $region7: #{tpu_custom_call.1} parent=1 // pred_check_branch
      %24 = sbr.rel (0) target = $region9
    $region8: #{tpu_custom_call.1} parent=1 // pred_region
      %s26 = ssub.s32 2048, 2048
      %27 = vsyncadd [#allocation6], %s26
      %s28 = sshll.u32 [#allocation5], 4
      %s29 = int_to_ptr.vmem [resolvable:$true] %s28
      %34 = dma.hbm_to_vmem [thread:$0]  %s1, 2048, %s29, [#allocation6], 128, 128, 8
    $region9: #{tpu_custom_call.1} parent=1 // pred_fallthru
      _
    // Predicated region
    $region10: #{tpu_custom_call.1} parent=1 // pred_check
      _
    $region11: #{tpu_custom_call.1} parent=1 // pred_check_branch
      %36 = sbr.rel (0) target = $region13
    $region12: #{tpu_custom_call.1} parent=1 // pred_region
      _
    $region13: #{tpu_custom_call.1} parent=1 // pred_fallthru
      _
    // Predicated region
    $region14: #{tpu_custom_call.1} parent=1 // pred_check
      _
    $region15: #{tpu_custom_call.1} parent=1 // pred_check_branch
      %38 = sbr.rel (0) target = $region17
    $region16: #{tpu_custom_call.1} parent=1 // pred_region
      %39 = dma.done [#allocation3], 256
    $region17: #{tpu_custom_call.1} parent=1 // pred_fallthru
      _
    // Predicated region
    $region18: #{tpu_custom_call.1} parent=1 // pred_check
      _
    $region19: #{tpu_custom_call.1} parent=1 // pred_check_branch
      %41 = sbr.rel (0) target = $region21
    $region20: #{tpu_custom_call.1} parent=1 // pred_region
      %42 = dma.done [#allocation6], 2048
    $region21: #{tpu_custom_call.1} parent=1 // pred_fallthru
      _
    %v43 = vld [vmem:[#allocation2] sm:$0xff]
    %v44 = vld [vmem:[#allocation2 + $0x8] sm:$0xff]
    %v45 = vld [vmem:[#allocation5] sm:$0xff]
    %v46 = vld [vmem:[#allocation5 + $0x8] sm:$0xff]
    %v47 = vld [vmem:[#allocation5 + $0x10] sm:$0xff]
    %v48 = vld [vmem:[#allocation5 + $0x18] sm:$0xff]
    %v49 = vld [vmem:[#allocation5 + $0x20] sm:$0xff]
    %v50 = vld [vmem:[#allocation5 + $0x28] sm:$0xff]
    %v51 = vld [vmem:[#allocation5 + $0x30] sm:$0xff]
    %v52 = vld [vmem:[#allocation5 + $0x38] sm:$0xff]
    %v53 = vld [vmem:[#allocation5 + $0x40] sm:$0xff]
    %v54 = vld [vmem:[#allocation5 + $0x48] sm:$0xff]
    %v55 = vld [vmem:[#allocation5 + $0x50] sm:$0xff]
    %v56 = vld [vmem:[#allocation5 + $0x58] sm:$0xff]
    %v57 = vld [vmem:[#allocation5 + $0x60] sm:$0xff]
    %v58 = vld [vmem:[#allocation5 + $0x68] sm:$0xff]
    %v59 = vld [vmem:[#allocation5 + $0x70] sm:$0xff]
    %v60 = vld [vmem:[#allocation5 + $0x78] sm:$0xff]
    %v61 = vld [vmem:[%s2] sm:$0x1]
    %v63 = vlaneseq
    %v64 = vshrl.u32 %v63, 7
    %v65 = vsub.s32 0, %v64
    %v66 = vrot.slane %v61, %v65
    %68 = vmatprep.subr.mxu0 0.0
    %69 = vmatpush1.msra.mxu0 %v45
    %70 = vmatprep.subr.mxu0 0.0
    %71 = vmatpush1.msra.mxu0 %v46
    %72 = vmatprep.subr.mxu0 0.0
    %73 = vmatpush1.msra.mxu0 %v47
    %74 = vmatprep.subr.mxu0 0.0
    %75 = vmatpush1.msra.mxu0 %v48
    %76 = vmatprep.subr.mxu0 0.0
    %77 = vmatpush1.msra.mxu0 %v49
    %78 = vmatprep.subr.mxu0 0.0
    %79 = vmatpush1.msra.mxu0 %v50
    %80 = vmatprep.subr.mxu0 0.0
    %81 = vmatpush1.msra.mxu0 %v51
    %82 = vmatprep.subr.mxu0 0.0
    %83 = vmatpush1.msra.mxu0 %v52
    %84 = vmatprep.subr.mxu0 0.0
    %85 = vmatpush1.msra.mxu0 %v53
    %86 = vmatprep.subr.mxu0 0.0
    %87 = vmatpush1.msra.mxu0 %v54
    %88 = vmatprep.subr.mxu0 0.0
    %89 = vmatpush1.msra.mxu0 %v55
    %90 = vmatprep.subr.mxu0 0.0
    %91 = vmatpush1.msra.mxu0 %v56
    %92 = vmatprep.subr.mxu0 0.0
    %93 = vmatpush1.msra.mxu0 %v57
    %94 = vmatprep.subr.mxu0 0.0
    %95 = vmatpush1.msra.mxu0 %v58
    %96 = vmatprep.subr.mxu0 0.0
    %97 = vmatpush1.msra.mxu0 %v59
    %98 = vmatprep.subr.mxu0 0.0
    %99 = vmatpush1.msra.mxu0 %v60
    %100 = vmatprep.subr.mxu0 0.0
    %101 = vmatpush1.msra.mxu0 0.0
    %102 = vmatprep.subr.mxu0 0.0
    %103 = vmatpush1.msra.mxu0 0.0
    %104 = vmatprep.subr.mxu0 0.0
    %105 = vmatpush1.msra.mxu0 0.0
    %106 = vmatprep.subr.mxu0 0.0
    %107 = vmatpush1.msra.mxu0 0.0
    %108 = vmatprep.subr.mxu0 0.0
    %109 = vmatpush1.msra.mxu0 0.0
    %110 = vmatprep.subr.mxu0 0.0
    %111 = vmatpush1.msra.mxu0 0.0
    %112 = vmatprep.subr.mxu0 0.0
    %113 = vmatpush1.msra.mxu0 0.0
    %114 = vmatprep.subr.mxu0 0.0
    %115 = vmatpush1.msra.mxu0 0.0
    %116 = vmatprep.subr.mxu0 0.0
    %117 = vmatpush1.msra.mxu0 0.0
    %118 = vmatprep.subr.mxu0 0.0
    %119 = vmatpush1.msra.mxu0 0.0
    %120 = vmatprep.subr.mxu0 0.0
    %121 = vmatpush1.msra.mxu0 0.0
    %122 = vmatprep.subr.mxu0 0.0
    %123 = vmatpush1.msra.mxu0 0.0
    %124 = vmatprep.subr.mxu0 0.0
    %125 = vmatpush1.msra.mxu0 0.0
    %126 = vmatprep.subr.mxu0 0.0
    %127 = vmatpush1.msra.mxu0 0.0
    %128 = vmatprep.subr.mxu0 0.0
    %129 = vmatpush1.msra.mxu0 0.0
    %130 = vmatprep.subr.mxu0 0.0
    %131 = vmatpush1.msra.mxu0 0.0
    %132 = vmatprep.mubr.f32.mxu0 0.0
    %133 = vmatmul.mubr.f32.gmra.mrb[0].mxu0 %v43
    %v134 = vpop.f32.mrb[0].mxu0
    %v135 = vadd.f32 %v66, %v134
    %v136 = vpop.f32.mrb[0].mxu0
    %137 = vmatprep.mubr.f32.mxu0 0.0
    %138 = vmatmul.mubr.f32.gmra.mrb[0].mxu0 %v44
    %v139 = vpop.f32.mrb[0].mxu0
    %v140 = vadd.f32 %v66, %v139
    %v141 = vpop.f32.mrb[0].mxu0
    %142 = vdwg.mxu0
    %143 = vst [vmem:[#allocation7] sm:$0xff] %v135
    %144 = vst [vmem:[#allocation7 + $0x8] sm:$0xff] %v140
    // Predicated region
    $region22: #{tpu_custom_call.1} parent=1 // pred_check
      _
    $region23: #{tpu_custom_call.1} parent=1 // pred_check_branch
      %146 = sbr.rel (0) target = $region25
    $region24: #{tpu_custom_call.1} parent=1 // pred_region
      %s148 = ssub.s32 256, 256
      %149 = vsyncadd [#allocation4], %s148
      %s150 = sshll.u32 [#allocation7], 4
      %s151 = int_to_ptr.vmem [resolvable:$true] %s150
      %156 = dma.vmem_to_hbm [thread:$0]  %s151, 256, %s3, [#allocation4], 128, 128, 8
    $region25: #{tpu_custom_call.1} parent=1 // pred_fallthru
      _
    // Predicated region
    $region26: #{tpu_custom_call.1} parent=1 // pred_check
      _
    $region27: #{tpu_custom_call.1} parent=1 // pred_check_branch
      %158 = sbr.rel (0) target = $region29
    $region28: #{tpu_custom_call.1} parent=1 // pred_region
      %159 = dma.done [#allocation4], 256
    $region29: #{tpu_custom_call.1} parent=1 // pred_fallthru
      _
    %160 = vsyncpa [#allocation3], 1
    %161 = vsyncpa [#allocation6], 1
    %162 = vsyncpa [#allocation4], 1

</llo_original>
